<compile_context>
chip_gen: v5e
topology: v5e:2x2
jax: 0.10.0
libtpu: 0.0.40
codegen_flags: <defaults>
</compile_context>

<pallas_src>
import jax
import jax.numpy as jnp
import numpy as np
from jax.experimental import pallas as pl
from jax.experimental.pallas import tpu as pltpu

# ---- static problem configuration (small, consistent with the module) ----
N, C, L = 2, 4, 16           # batch, n_inputs == n_outputs, sequence length
K, STRIDE, DIL = 3, 1, 1     # kernel_size, stride, dilation
PAD = (K - 1) * DIL          # Conv1d padding (chomped afterwards -> causal)
assert STRIDE == 1           # TODO(synk): stride > 1 not exercised by this block
assert N == 2                # softmax-over-N specialized to sigmoid (N == 2)
LPAD = L + PAD               # left-pad only; the chomped right pad is never read
NL = N * L
HEAD_DIM = C // C            # num_heads == embed_dim -> head_dim == 1
SCALE = 1.0 / float(np.sqrt(HEAD_DIM))   # == 1.0, dropped inside the kernel

# ---- packed-parameter layout: single (PROWS, PCOLS) array, one DMA.
#      Every block starts on an 8-row boundary -> sublane-aligned slices. ----
PCOLS = max(K, C)                         # 4
R_CW,   NR_CW   = 0,  8                   # (C, K)   depthwise conv taps
R_WQKV, NR_WQKV = 8,  16                  # (3C, C)  stacked [Wq; Wk; Wv]
R_BQKV, NR_BQKV = 24, 16                  # (3C, 1)  QKV bias (+ folded conv bias)
R_WF,   NR_WF   = 40, 8                   # (C, C)   wl @ wo  (out_proj+Linear fused)
R_BF,   NR_BF   = 48, 8                   # (C, 1)   wl @ bo + bl
R_AL,   NR_AL   = 56, 8                   # (C, 1)   PReLU slope
PROWS = 64


def _first_block_kernel(x_ref, prm_ref, out_ref, conv_buf, attn_buf):
    # ---- unpack the single packed-parameter tile (all slices 8-row aligned) ----
    cw = prm_ref[R_CW:R_CW + C, 0:K]                   # (C, K)
    wqkv = prm_ref[R_WQKV:R_WQKV + 3 * C, 0:C]         # (3C, C)
    bqkv = prm_ref[R_BQKV:R_BQKV + 3 * C, 0:1]         # (3C, 1)
    wf = prm_ref[R_WF:R_WF + C, 0:C]                   # (C, C)
    bf = prm_ref[R_BF:R_BF + C, 0:1]                   # (C, 1)
    alpha = prm_ref[R_AL:R_AL + C, 0:1]                # (C, 1)

    # ---- depthwise causal conv; assemble all batches into one (C, N*L) slab.
    #      conv bias is folded into bqkv host-side, so no bias add here.
    for n in range(N):
        base = n * LPAD
        acc = cw[:, 0:1] * x_ref[:, base:base + L]      # k = 0 tap (no zero init)
        for k in range(1, K):
            acc = acc + cw[:, k:k + 1] * x_ref[:, base + k * DIL:base + k * DIL + L]
        conv_buf[:, n * L:(n + 1) * L] = acc
    conv = conv_buf[...]                                # (C, N*L)

    # ---- one wide QKV projection (stacked weights, bf16 operands, f32 acc) ----
    qkv = jnp.dot(wqkv.astype(jnp.bfloat16), conv.astype(jnp.bfloat16),
                  preferred_element_type=jnp.float32) + bqkv          # (3C, N*L)
    q = qkv[0:C, :]
    k_ = qkv[C:2 * C, :]
    v = qkv[2 * C:3 * C, :]

    # ---- attention over the batch axis (seq len N == 2, head_dim == 1,
    #      scale == 1): softmax over two keys == sigmoid of the score diff.
    k0, k1 = k_[:, 0:L], k_[:, L:NL]
    v0, v1 = v[:, 0:L], v[:, L:NL]
    dk = k1 - k0
    dv = v1 - v0
    for i in range(N):
        qi = q[:, i * L:(i + 1) * L]
        # p_i1 = softmax weight of key 1 = sigmoid(s_i1 - s_i0) = sigmoid(q_i * (k1 - k0))
        w1 = pl.reciprocal(1.0 + jnp.exp(-qi * dk), approx=True)
        attn_buf[:, i * L:(i + 1) * L] = v0 + w1 * dv
    attn = attn_buf[...]                                # (C, N*L)

    # ---- fused out_proj + Linear, PReLU, one lane-dense store ----
    lin = jnp.dot(wf.astype(jnp.bfloat16), attn.astype(jnp.bfloat16),
                  preferred_element_type=jnp.float32) + bf            # (C, N*L)
    out_ref[...] = jnp.where(lin > 0, lin, alpha * lin)


def _pack_params(p):
    """Fold/fuse parameters and pack them into a single (PROWS, PCOLS) array."""
    wqkv = jnp.concatenate([p["wq"], p["wk"], p["wv"]], axis=0)       # (3C, C)
    bqkv = jnp.concatenate([p["bq"], p["bk"], p["bv"]], axis=0)       # (3C,)
    # fold conv bias:  Wqkv @ (conv + cb) + b  ==  Wqkv @ conv + (Wqkv @ cb + b)
    bqkv = wqkv @ p["conv_b"] + bqkv
    # fuse out_proj and Linear (no nonlinearity in between):
    wf = p["wl"] @ p["wo"]                                            # (C, C)
    bf = p["wl"] @ p["bo"] + p["bl"]                                  # (C,)

    def block(a, rows, padded_rows):
        a = a.reshape(rows, -1).astype(jnp.float32)
        return jnp.pad(a, ((0, padded_rows - rows), (0, PCOLS - a.shape[1])))

    packed = jnp.concatenate([
        block(p["conv_w"], C, NR_CW),
        block(wqkv, 3 * C, NR_WQKV),
        block(bqkv, 3 * C, NR_BQKV),
        block(wf, C, NR_WF),
        block(bf, C, NR_BF),
        block(p["alpha"], C, NR_AL),
    ], axis=0)                                                        # (PROWS, PCOLS)
    assert packed.shape == (PROWS, PCOLS)
    return packed


@jax.jit
def first_block_forward(x, params):
    # layout plumbing only: left (causal) pad, batch folded into the lane axis
    xpad = jnp.pad(x, ((0, 0), (0, 0), (PAD, 0)))          # (N, C, LPAD)
    x2d = xpad.transpose(1, 0, 2).reshape(C, N * LPAD)     # (C, N*LPAD)
    prm = _pack_params(params)

    out2d = pl.pallas_call(
        _first_block_kernel,
        out_shape=jax.ShapeDtypeStruct((C, NL), jnp.float32),
        grid_spec=pltpu.PrefetchScalarGridSpec(
            num_scalar_prefetch=0,
            grid=(1,),  # single program; whole problem fits one VMEM tile
            in_specs=[
                pl.BlockSpec((C, N * LPAD), lambda i: (0, 0)),
                pl.BlockSpec((PROWS, PCOLS), lambda i: (0, 0)),
            ],
            out_specs=pl.BlockSpec((C, NL), lambda i: (0, 0)),
            scratch_shapes=[
                pltpu.VMEM((C, NL), jnp.float32),   # conv slab
                pltpu.VMEM((C, NL), jnp.float32),   # attention slab
            ],
        ),
        compiler_params=pltpu.CompilerParams(
            dimension_semantics=("arbitrary",)),
    )(x2d, prm)

    # back to the PyTorch output layout (N, C, L)
    return out2d.reshape(C, N, L).transpose(1, 0, 2)


def ref_forward(x, p):
    """Pure-JAX reference of the PyTorch forward (for validation)."""
    hi = jax.lax.Precision.HIGHEST
    xpad = jnp.pad(x, ((0, 0), (0, 0), (PAD, PAD)))
    cols = jnp.stack([xpad[:, :, k * DIL:k * DIL + L] for k in range(K)], -1)
    conv = jnp.einsum('nclk,ck->ncl', cols, p["conv_w"],
                      precision=hi) + p["conv_b"][None, :, None]
    y = conv.transpose(0, 2, 1)                       # (N, L, C) == (seq, batch, embed)
    q = jnp.einsum('ilc,oc->ilo', y, p["wq"], precision=hi) + p["bq"]
    k_ = jnp.einsum('ilc,oc->ilo', y, p["wk"], precision=hi) + p["bk"]
    v = jnp.einsum('ilc,oc->ilo', y, p["wv"], precision=hi) + p["bv"]
    s = jnp.einsum('ilc,jlc->lcij', q * SCALE, k_, precision=hi)
    pa = jax.nn.softmax(s, axis=-1)
    a = jnp.einsum('lcij,jlc->ilc', pa, v, precision=hi)
    o = jnp.einsum('ilc,oc->ilo', a, p["wo"], precision=hi) + p["bo"]
    lin = jnp.einsum('ilc,oc->ilo', o, p["wl"], precision=hi) + p["bl"]
    out = lin.transpose(0, 2, 1)                      # (N, C, L)
    alpha = p["alpha"][None, :, None]
    return jnp.where(out > 0, out, alpha * out)


if __name__ == "__main__":
    key = jax.random.PRNGKey(0)
    kk = jax.random.split(key, 12)
    params = {
        "conv_w": 0.1 * jax.random.normal(kk[0], (C, K), jnp.float32),   # (C,1,K) squeezed
        "conv_b": 0.05 * jax.random.normal(kk[1], (C,), jnp.float32),
        "wq": 0.1 * jax.random.normal(kk[2], (C, C), jnp.float32),
        "bq": 0.05 * jax.random.normal(kk[3], (C,), jnp.float32),
        "wk": 0.1 * jax.random.normal(kk[4], (C, C), jnp.float32),
        "bk": 0.05 * jax.random.normal(kk[5], (C,), jnp.float32),
        "wv": 0.1 * jax.random.normal(kk[6], (C, C), jnp.float32),
        "bv": 0.05 * jax.random.normal(kk[7], (C,), jnp.float32),
        "wo": 0.1 * jax.random.normal(kk[8], (C, C), jnp.float32),
        "bo": 0.05 * jax.random.normal(kk[9], (C,), jnp.float32),
        "wl": 0.1 * jax.random.normal(kk[10], (C, C), jnp.float32),
        "bl": 0.05 * jax.random.normal(kk[11], (C,), jnp.float32),
        "alpha": jnp.full((C,), 0.25, jnp.float32),   # PReLU default init
    }
    x = jax.random.normal(jax.random.PRNGKey(1), (N, C, L), jnp.float32)

    out = jax.block_until_ready(first_block_forward(x, params))
    ref = jax.block_until_ready(ref_forward(x, params))
    assert out.shape == (N, C, L)
    np.testing.assert_allclose(np.asarray(out), np.asarray(ref),
                               rtol=1e-2, atol=1e-2)
    print("KERNEL_OK")
</pallas_src>

<mosaic_0001>
module attributes {stable_mosaic.version = 11 : i64} {
  func.func @_first_block_kernel(%arg0: i32, %arg1: memref<4x36xf32, #tpu.memory_space<vmem>>, %arg2: memref<64x4xf32, #tpu.memory_space<vmem>>, %arg3: memref<4x32xf32, #tpu.memory_space<vmem>>, %arg4: memref<4x32xf32, #tpu.memory_space<vmem>>, %arg5: memref<4x32xf32, #tpu.memory_space<vmem>>) attributes {dimension_semantics = [#tpu.dimension_semantics<arbitrary>], iteration_bounds = array<i64: 1>, scalar_prefetch = 0 : i64, scratch_operands = 2 : i64, tpu.core_type = #tpu.core_type<tc>, window_params = [{pipeline_mode = #tpu.pipeline_mode<synchronous>, transform_indices = @transform_0, window_bounds = array<i64: 4, 36>}, {pipeline_mode = #tpu.pipeline_mode<synchronous>, transform_indices = @transform_1, window_bounds = array<i64: 64, 4>}, {pipeline_mode = #tpu.pipeline_mode<synchronous>, transform_indices = @transform_2, window_bounds = array<i64: 4, 32>}]} {
    %c0 = arith.constant 0 : index
    %c0_0 = arith.constant 0 : index
    %0 = vector.load %arg2[%c0, %c0_0] : memref<64x4xf32, #tpu.memory_space<vmem>>, vector<4x3xf32>
    %c8 = arith.constant 8 : index
    %c0_1 = arith.constant 0 : index
    %1 = vector.load %arg2[%c8, %c0_1] : memref<64x4xf32, #tpu.memory_space<vmem>>, vector<12x4xf32>
    %c24 = arith.constant 24 : index
    %c0_2 = arith.constant 0 : index
    %2 = vector.load %arg2[%c24, %c0_2] : memref<64x4xf32, #tpu.memory_space<vmem>>, vector<12x1xf32>
    %c40 = arith.constant 40 : index
    %c0_3 = arith.constant 0 : index
    %3 = vector.load %arg2[%c40, %c0_3] : memref<64x4xf32, #tpu.memory_space<vmem>>, vector<4x4xf32>
    %c48 = arith.constant 48 : index
    %c0_4 = arith.constant 0 : index
    %4 = vector.load %arg2[%c48, %c0_4] : memref<64x4xf32, #tpu.memory_space<vmem>>, vector<4x1xf32>
    %c56 = arith.constant 56 : index
    %c0_5 = arith.constant 0 : index
    %5 = vector.load %arg2[%c56, %c0_5] : memref<64x4xf32, #tpu.memory_space<vmem>>, vector<4x1xf32>
    %6 = vector.extract_strided_slice %0 {offsets = [0, 0], sizes = [4, 1], strides = [1, 1]} : vector<4x3xf32> to vector<4x1xf32>
    %c0_6 = arith.constant 0 : index
    %c0_7 = arith.constant 0 : index
    %7 = vector.load %arg1[%c0_6, %c0_7] : memref<4x36xf32, #tpu.memory_space<vmem>>, vector<4x16xf32>
    %8 = vector.broadcast %6 : vector<4x1xf32> to vector<4x16xf32>
    %9 = arith.mulf %8, %7 : vector<4x16xf32>
    %10 = vector.extract_strided_slice %0 {offsets = [0, 1], sizes = [4, 1], strides = [1, 1]} : vector<4x3xf32> to vector<4x1xf32>
    %c0_8 = arith.constant 0 : index
    %c1 = arith.constant 1 : index
    %11 = vector.load %arg1[%c0_8, %c1] : memref<4x36xf32, #tpu.memory_space<vmem>>, vector<4x16xf32>
    %12 = vector.broadcast %10 : vector<4x1xf32> to vector<4x16xf32>
    %13 = arith.mulf %12, %11 : vector<4x16xf32>
    %14 = arith.addf %9, %13 : vector<4x16xf32>
    %15 = vector.extract_strided_slice %0 {offsets = [0, 2], sizes = [4, 1], strides = [1, 1]} : vector<4x3xf32> to vector<4x1xf32>
    %c0_9 = arith.constant 0 : index
    %c2 = arith.constant 2 : index
    %16 = vector.load %arg1[%c0_9, %c2] : memref<4x36xf32, #tpu.memory_space<vmem>>, vector<4x16xf32>
    %17 = vector.broadcast %15 : vector<4x1xf32> to vector<4x16xf32>
    %18 = arith.mulf %17, %16 : vector<4x16xf32>
    %19 = arith.addf %14, %18 : vector<4x16xf32>
    %c0_10 = arith.constant 0 : index
    %c0_11 = arith.constant 0 : index
    %20 = vector.load %arg4[%c0_10, %c0_11] : memref<4x32xf32, #tpu.memory_space<vmem>>, vector<4x16xf32>
    tpu.vector_store %arg4[%c0_10, %c0_11], %19 {strides = array<i32>} : memref<4x32xf32, #tpu.memory_space<vmem>>, vector<4x16xf32>,
    %21 = vector.extract_strided_slice %0 {offsets = [0, 0], sizes = [4, 1], strides = [1, 1]} : vector<4x3xf32> to vector<4x1xf32>
    %c0_12 = arith.constant 0 : index
    %c18 = arith.constant 18 : index
    %22 = vector.load %arg1[%c0_12, %c18] : memref<4x36xf32, #tpu.memory_space<vmem>>, vector<4x16xf32>
    %23 = vector.broadcast %21 : vector<4x1xf32> to vector<4x16xf32>
    %24 = arith.mulf %23, %22 : vector<4x16xf32>
    %25 = vector.extract_strided_slice %0 {offsets = [0, 1], sizes = [4, 1], strides = [1, 1]} : vector<4x3xf32> to vector<4x1xf32>
    %c0_13 = arith.constant 0 : index
    %c19 = arith.constant 19 : index
    %26 = vector.load %arg1[%c0_13, %c19] : memref<4x36xf32, #tpu.memory_space<vmem>>, vector<4x16xf32>
    %27 = vector.broadcast %25 : vector<4x1xf32> to vector<4x16xf32>
    %28 = arith.mulf %27, %26 : vector<4x16xf32>
    %29 = arith.addf %24, %28 : vector<4x16xf32>
    %30 = vector.extract_strided_slice %0 {offsets = [0, 2], sizes = [4, 1], strides = [1, 1]} : vector<4x3xf32> to vector<4x1xf32>
    %c0_14 = arith.constant 0 : index
    %c20 = arith.constant 20 : index
    %31 = vector.load %arg1[%c0_14, %c20] : memref<4x36xf32, #tpu.memory_space<vmem>>, vector<4x16xf32>
    %32 = vector.broadcast %30 : vector<4x1xf32> to vector<4x16xf32>
    %33 = arith.mulf %32, %31 : vector<4x16xf32>
    %34 = arith.addf %29, %33 : vector<4x16xf32>
    %c0_15 = arith.constant 0 : index
    %c16 = arith.constant 16 : index
    %35 = vector.load %arg4[%c0_15, %c16] : memref<4x32xf32, #tpu.memory_space<vmem>>, vector<4x16xf32>
    tpu.vector_store %arg4[%c0_15, %c16], %34 {strides = array<i32>} : memref<4x32xf32, #tpu.memory_space<vmem>>, vector<4x16xf32>,
    %c0_16 = arith.constant 0 : index
    %c0_17 = arith.constant 0 : index
    %36 = vector.load %arg4[%c0_16, %c0_17] : memref<4x32xf32, #tpu.memory_space<vmem>>, vector<4x32xf32>
    %37 = arith.truncf %1 : vector<12x4xf32> to vector<12x4xbf16>
    %38 = arith.truncf %36 : vector<4x32xf32> to vector<4x32xbf16>
    %cst = arith.constant dense<0.000000e+00> : vector<12x32xf32>
    %39 = tpu.matmul %37, %38, %cst {dimension_numbers = #tpu.dot_dimension_numbers<[1], [0], [0], [1], [0, 0, 1, 1], [], []>} : vector<12x4xbf16>, vector<4x32xbf16>, vector<12x32xf32> -> vector<12x32xf32>
    %40 = vector.broadcast %2 : vector<12x1xf32> to vector<12x32xf32>
    %41 = arith.addf %39, %40 : vector<12x32xf32>
    %42 = vector.extract_strided_slice %41 {offsets = [0, 0], sizes = [4, 32], strides = [1, 1]} : vector<12x32xf32> to vector<4x32xf32>
    %43 = vector.extract_strided_slice %41 {offsets = [4, 0], sizes = [4, 32], strides = [1, 1]} : vector<12x32xf32> to vector<4x32xf32>
    %44 = vector.extract_strided_slice %41 {offsets = [8, 0], sizes = [4, 32], strides = [1, 1]} : vector<12x32xf32> to vector<4x32xf32>
    %45 = vector.extract_strided_slice %43 {offsets = [0, 0], sizes = [4, 16], strides = [1, 1]} : vector<4x32xf32> to vector<4x16xf32>
    %46 = vector.extract_strided_slice %43 {offsets = [0, 16], sizes = [4, 16], strides = [1, 1]} : vector<4x32xf32> to vector<4x16xf32>
    %47 = vector.extract_strided_slice %44 {offsets = [0, 0], sizes = [4, 16], strides = [1, 1]} : vector<4x32xf32> to vector<4x16xf32>
    %48 = vector.extract_strided_slice %44 {offsets = [0, 16], sizes = [4, 16], strides = [1, 1]} : vector<4x32xf32> to vector<4x16xf32>
    %49 = arith.subf %46, %45 : vector<4x16xf32>
    %50 = arith.subf %48, %47 : vector<4x16xf32>
    %51 = vector.extract_strided_slice %42 {offsets = [0, 0], sizes = [4, 16], strides = [1, 1]} : vector<4x32xf32> to vector<4x16xf32>
    %cst_18 = arith.constant 0.000000e+00 : f32
    %52 = vector.broadcast %cst_18 : f32 to vector<4x16xf32>
    %53 = arith.subf %52, %51 : vector<4x16xf32>
    %54 = arith.mulf %53, %49 : vector<4x16xf32>
    %55 = math.exp %54 : vector<4x16xf32>
    %cst_19 = arith.constant 1.000000e+00 : f32
    %56 = vector.broadcast %cst_19 : f32 to vector<4x16xf32>
    %57 = arith.addf %56, %55 : vector<4x16xf32>
    %58 = tpu.reciprocal %57 {approx = true} : vector<4x16xf32> -> vector<4x16xf32>
    %59 = arith.mulf %58, %50 : vector<4x16xf32>
    %60 = arith.addf %47, %59 : vector<4x16xf32>
    %c0_20 = arith.constant 0 : index
    %c0_21 = arith.constant 0 : index
    %61 = vector.load %arg5[%c0_20, %c0_21] : memref<4x32xf32, #tpu.memory_space<vmem>>, vector<4x16xf32>
    tpu.vector_store %arg5[%c0_20, %c0_21], %60 {strides = array<i32>} : memref<4x32xf32, #tpu.memory_space<vmem>>, vector<4x16xf32>,
    %62 = vector.extract_strided_slice %42 {offsets = [0, 16], sizes = [4, 16], strides = [1, 1]} : vector<4x32xf32> to vector<4x16xf32>
    %cst_22 = arith.constant 0.000000e+00 : f32
    %63 = vector.broadcast %cst_22 : f32 to vector<4x16xf32>
    %64 = arith.subf %63, %62 : vector<4x16xf32>
    %65 = arith.mulf %64, %49 : vector<4x16xf32>
    %66 = math.exp %65 : vector<4x16xf32>
    %cst_23 = arith.constant 1.000000e+00 : f32
    %67 = vector.broadcast %cst_23 : f32 to vector<4x16xf32>
    %68 = arith.addf %67, %66 : vector<4x16xf32>
    %69 = tpu.reciprocal %68 {approx = true} : vector<4x16xf32> -> vector<4x16xf32>
    %70 = arith.mulf %69, %50 : vector<4x16xf32>
    %71 = arith.addf %47, %70 : vector<4x16xf32>
    %c0_24 = arith.constant 0 : index
    %c16_25 = arith.constant 16 : index
    %72 = vector.load %arg5[%c0_24, %c16_25] : memref<4x32xf32, #tpu.memory_space<vmem>>, vector<4x16xf32>
    tpu.vector_store %arg5[%c0_24, %c16_25], %71 {strides = array<i32>} : memref<4x32xf32, #tpu.memory_space<vmem>>, vector<4x16xf32>,
    %c0_26 = arith.constant 0 : index
    %c0_27 = arith.constant 0 : index
    %73 = vector.load %arg5[%c0_26, %c0_27] : memref<4x32xf32, #tpu.memory_space<vmem>>, vector<4x32xf32>
    %74 = arith.truncf %3 : vector<4x4xf32> to vector<4x4xbf16>
    %75 = arith.truncf %73 : vector<4x32xf32> to vector<4x32xbf16>
    %cst_28 = arith.constant dense<0.000000e+00> : vector<4x32xf32>
    %76 = tpu.matmul %74, %75, %cst_28 {dimension_numbers = #tpu.dot_dimension_numbers<[1], [0], [0], [1], [0, 0, 1, 1], [], []>} : vector<4x4xbf16>, vector<4x32xbf16>, vector<4x32xf32> -> vector<4x32xf32>
    %77 = vector.broadcast %4 : vector<4x1xf32> to vector<4x32xf32>
    %78 = arith.addf %76, %77 : vector<4x32xf32>
    %cst_29 = arith.constant 0.000000e+00 : f32
    %79 = vector.broadcast %cst_29 : f32 to vector<4x32xf32>
    %80 = arith.cmpf ogt, %78, %79 : vector<4x32xf32>
    %81 = vector.broadcast %5 : vector<4x1xf32> to vector<4x32xf32>
    %82 = arith.mulf %81, %78 : vector<4x32xf32>
    %83 = arith.select %80, %78, %82 : vector<4x32xi1>, vector<4x32xf32>
    %c0_30 = arith.constant 0 : index
    %c0_31 = arith.constant 0 : index
    %84 = vector.load %arg3[%c0_30, %c0_31] : memref<4x32xf32, #tpu.memory_space<vmem>>, vector<4x32xf32>
    tpu.vector_store %arg3[%c0_30, %c0_31], %83 {strides = array<i32>} : memref<4x32xf32, #tpu.memory_space<vmem>>, vector<4x32xf32>,
    return
  }
  func.func @transform_0(%arg0: i32) -> (i32, i32) {
    %c0_i32 = arith.constant 0 : i32
    %c0_i32_0 = arith.constant 0 : i32
    %c0_i32_1 = arith.constant 0 : i32
    return %c0_i32, %c0_i32_0 : i32, i32
  }
  func.func @transform_1(%arg0: i32) -> (i32, i32) {
    %c0_i32 = arith.constant 0 : i32
    %c0_i32_0 = arith.constant 0 : i32
    %c0_i32_1 = arith.constant 0 : i32
    return %c0_i32, %c0_i32_0 : i32, i32
  }
  func.func @transform_2(%arg0: i32) -> (i32, i32) {
    %c0_i32 = arith.constant 0 : i32
    %c0_i32_0 = arith.constant 0 : i32
    %c0_i32_1 = arith.constant 0 : i32
    return %c0_i32, %c0_i32_0 : i32, i32
  }
}

</mosaic_0001>

<llo_original>
// kernel: first_block_forward.1
$region0: #{first_block_forward.1}
  #allocation0 [shape = 'u32[]', space=smem, size = 0x4, offset = 0x4, fixed_abs, tag = 'smem constant byte address 0x4 - core index']
  #allocation1 [shape = 'u32[72,128]{1,0:T(1,128)}', space=vmem, size = 0x9000, scoped, tag = 'internal scratch']
  #allocation2 [shape = 'f32[4,32]{1,0:T(4,128)}', space=vmem, size = 0x800, scoped, tag = 'scratch operand']
  #allocation3 [shape = 'f32[4,32]{1,0:T(4,128)}', space=vmem, size = 0x800, scoped, tag = 'scratch operand']
  %s0 = inlined_call_operand.vmem [shape: f32[4,36], index: 0, kind: input, shape index: {}]
  %s1 = inlined_call_operand.vmem [shape: f32[64,4], index: 1, kind: input, shape index: {}]
  %s2 = inlined_call_operand.vmem [shape: f32[4,32], index: 2, kind: output, shape index: {}]
  %s3 = sld [smem:[#allocation0]]
  $region18: #{first_block_forward.1} parent=0
    _
  %s5 = ssub.s32 1, %s3
  %s6 = scalar_select 0, %s5, %s3
  // Predicated region
  $region2: #{first_block_forward.1} parent=0 // pred_check
    _
  $region3: #{first_block_forward.1} parent=0 // pred_check_branch
    %8 = sbr.rel (0) target = $region5
  $region4: #{first_block_forward.1} parent=0 // pred_region
    _
  $region5: #{first_block_forward.1} parent=0 // pred_fallthru
    _
  // Predicated region
  $region6: #{first_block_forward.1} parent=0 // pred_check
    _
  $region7: #{first_block_forward.1} parent=0 // pred_check_branch
    %10 = sbr.rel (0) target = $region9
  $region8: #{first_block_forward.1} parent=0 // pred_region
    _
  $region9: #{first_block_forward.1} parent=0 // pred_fallthru
    _
  %v12 = vld [vmem:[%s1] sm:$0xf]
  %v13 = vld [vmem:[%s1 + $0x8] sm:$0xff]
  %v14 = vld [vmem:[%s1 + $0x10] sm:$0xf]
  %v15 = vld [vmem:[%s1 + $0x18] sm:$0xff]
  %v16 = vld [vmem:[%s1 + $0x20] sm:$0xf]
  %v17 = vld [vmem:[%s1 + $0x28] sm:$0xf]
  %v18 = vld [vmem:[%s1 + $0x30] sm:$0xf]
  %v19 = vld [vmem:[%s1 + $0x38] sm:$0xf]
  %v20 = vld [vmem:[%s0] sm:$0xf]
  %22 = vset.pattern.permute.xlu0 0
  %23 = vperm.xlu0 %22, %v12
  %v24 = vpop.permute.xlu0 %23
  %v26 = vmul.f32 %v24, %v20
  %27 = vset.pattern.permute.xlu0 1
  %28 = vperm.xlu0 %27, %v12
  %v29 = vpop.permute.xlu0 %28
  %v31 = vmul.f32 %v29, %v20
  %33 = vrot.lane.b32.xlu0 %v31, 127
  %v34 = vpop.permute.xlu0 %33
  %v36 = vadd.f32 %v26, %v34
  %37 = vset.pattern.permute.xlu0 2
  %38 = vperm.xlu0 %37, %v12
  %v39 = vpop.permute.xlu0 %38
  %v41 = vmul.f32 %v39, %v20
  %43 = vrot.lane.b32.xlu0 %v41, 126
  %v44 = vpop.permute.xlu0 %43
  %v46 = vadd.f32 %v36, %v44
  %vm47 = vcmask 125952
  %48 = vst.msk [vmem:[#allocation2] sm:$0xf] %vm47, %v46
  %v49 = vld [vmem:[%s0] sm:$0xf]
  %v50 = vmul.f32 %v24, %v49
  %v51 = vmul.f32 %v29, %v49
  %53 = vrot.lane.b32.xlu0 %v51, 127
  %v54 = vpop.permute.xlu0 %53
  %v56 = vadd.f32 %v50, %v54
  %v57 = vmul.f32 %v39, %v49
  %59 = vrot.lane.b32.xlu0 %v57, 126
  %v60 = vpop.permute.xlu0 %59
  %v62 = vadd.f32 %v56, %v60
  %64 = vrot.lane.b32.xlu0 %v62, 126
  %v65 = vpop.permute.xlu0 %64
  %vm67 = vcmask 257152
  %68 = vst.msk [vmem:[#allocation2] sm:$0xf] %vm67, %v65
  %v69 = vld [vmem:[#allocation2] sm:$0xf]
  %v70 = vpack.c.bf16 %v14, %v13
  %v71 = vpack.c.bf16 %v69, %v69
  %73 = vset.pattern.permute.xlu0 0
  %74 = vperm.xlu0 %73, %v15
  %v75 = vpop.permute.xlu0 %74
  %78 = vset.pattern.permute.xlu0 0
  %79 = vperm.xlu0 %78, %v16
  %v80 = vpop.permute.xlu0 %79
  %vm82 = vcmask 31744
  %v84 = vsel %vm82, %v70, 0
  %vm86 = vcmask 1041408
  %v88 = vsel %vm86, %v71, 0
  %90 = vmatpush.bf16.msra.mxu0 0
  %91 = vmatpush.bf16.msra.mxu0 0
  %92 = vmatpush.bf16.msra.mxu0 0
  %93 = vmatpush.bf16.msra.mxu0 0
  %94 = vmatpush.bf16.msra.mxu0 0
  %95 = vmatpush.bf16.msra.mxu0 0
  %96 = vmatpush.bf16.msra.mxu0 0
  %97 = vmatpush.bf16.msra.mxu0 %v88
  %98 = vmatmul.bf16.gmra.mxu0 %v84
  %v99 = vpop.f32.mrf.mxu0
  %v100 = vadd.f32 %v75, %v99
  %v101 = vpop.f32.mrf.mxu0
  %v102 = vadd.f32 %v80, %v101
  %103 = vdwg.mxu0
  %105 = vrot.lane.b32.xlu0 %v100, 16
  %v106 = vpop.permute.xlu0 %105
  %v108 = vsub.f32 %v100, %v106
  %110 = vrot.lane.b32.xlu0 %v102, 16
  %v111 = vpop.permute.xlu0 %110
  %v113 = vsub.f32 %v102, %v111
  %v114 = vsub.f32 0.0, %v100
  %v116 = vrot.slane %v108, 4
  %117 = vrot.lane.b32.xlu0 %v116, 112
  %v118 = vpop.permute.xlu0 %117
  %v120 = vmul.f32 %v114, %v118
  %v121 = vmul.f32 %v120, 1.442695
  %v122 = vpow.pop %v121
  %v123 = vadd.f32 %v122, 1.0
  %v124 = vrcp.pop %v123
  %126 = vrot.lane.b32.xlu0 %v113, 112
  %v127 = vpop.permute.xlu0 %126
  %v129 = vmul.f32 %v124, %v127
  %v130 = vadd.f32 %v102, %v129
  %131 = vst.msk [vmem:[#allocation3] sm:$0xf] %vm47, %v130
  %v133 = vmul.f32 %v114, %v116
  %v134 = vmul.f32 %v133, 1.442695
  %v135 = vpow.pop %v134
  %v136 = vadd.f32 %v135, 1.0
  %v137 = vrcp.pop %v136
  %v138 = vmul.f32 %v137, %v113
  %140 = vrot.lane.b32.xlu0 %v138, 112
  %v141 = vpop.permute.xlu0 %140
  %v143 = vadd.f32 %v102, %v141
  %145 = vrot.lane.b32.xlu0 %v143, 16
  %v146 = vpop.permute.xlu0 %145
  %148 = vst.msk [vmem:[#allocation3] sm:$0xf] %vm67, %v146
  %v149 = vld [vmem:[#allocation3] sm:$0xf]
  %v150 = vpack.c.bf16 %v17, %v17
  %v151 = vpack.c.bf16 %v149, %v149
  %153 = vset.pattern.permute.xlu0 0
  %154 = vperm.xlu0 %153, %v18
  %v155 = vpop.permute.xlu0 %154
  %v158 = vsel %vm82, %v150, 0
  %v161 = vsel %vm86, %v151, 0
  %163 = vmatpush.bf16.msra.mxu0 0
  %164 = vmatpush.bf16.msra.mxu0 0
  %165 = vmatpush.bf16.msra.mxu0 0
  %166 = vmatpush.bf16.msra.mxu0 0
  %167 = vmatpush.bf16.msra.mxu0 0
  %168 = vmatpush.bf16.msra.mxu0 0
  %169 = vmatpush.bf16.msra.mxu0 0
  %170 = vmatpush.bf16.msra.mxu0 %v161
  %171 = vmatmul.bf16.gmra.mxu0 %v158
  %v172 = vpop.f32.mrf.mxu0
  %v173 = vadd.f32 %v155, %v172
  %v174 = vpop.f32.mrf.mxu0
  %175 = vdwg.mxu0
  %vm176 = vcmp.gt.f32.partialorder %v173, 0.0
  %178 = vset.pattern.permute.xlu0 0
  %179 = vperm.xlu0 %178, %v19
  %v180 = vpop.permute.xlu0 %179
  %v182 = vmul.f32 %v180, %v173
  %v183 = vsel %vm176, %v173, %v182
  %vm184 = vcmask 257024
  %185 = vst.msk [vmem:[%s2] sm:$0xf] %vm184, %v183
  // Predicated region
  $region10: #{first_block_forward.1} parent=0 // pred_check
    _
  $region11: #{first_block_forward.1} parent=0 // pred_check_branch
    %187 = sbr.rel (0) target = $region13
  $region12: #{first_block_forward.1} parent=0 // pred_region
    _
  $region13: #{first_block_forward.1} parent=0 // pred_fallthru
    _
  // Predicated region
  $region14: #{first_block_forward.1} parent=0 // pred_check
    _
  $region15: #{first_block_forward.1} parent=0 // pred_check_branch
    %189 = sbr.rel (0) target = $region17
  $region16: #{first_block_forward.1} parent=0 // pred_region
    _
  $region17: #{first_block_forward.1} parent=0 // pred_fallthru
    _

</llo_original>
